<compile_context>
chip_gen: v7x
topology: tpu7x:2x2x1
jax: 0.10.0
libtpu: 0.0.40
codegen_flags: <defaults>
</compile_context>

<pallas_src>
import functools
import math

import jax
import jax.numpy as jnp
from jax.experimental import pallas as pl
from jax.experimental.pallas import tpu as pltpu


def _label_smoothing_kernel(x_ref, t_ref, out_ref, *, confidence, smooth_val,
                            tile_n, num_classes):
    i = pl.program_id(1)  # inner (reduction) axis over row blocks

    # Output block is resident across the inner axis -> it is the accumulator.
    @pl.when(i == 0)
    def _():
        out_ref[...] = jnp.zeros_like(out_ref)

    x = x_ref[...].astype(jnp.float32)           # (tile_n, C) probabilities
    logx = jnp.log(x)                            # x.log()  (EUP)

    tgt = t_ref[...]                             # (tile_n, 1) int32
    cls = jax.lax.broadcasted_iota(jnp.int32, (tile_n, num_classes), 1)
    coeff = jnp.where(cls == tgt,
                      jnp.float32(confidence),
                      jnp.float32(smooth_val))   # = true_dist

    # Per-element true_dist * log(x).  (The xlogy(t,t) constant is added in the
    # wrapper.)  NOTE: matches PyTorch kl_div semantics exactly, including the
    # NaN that both produce for a zero target paired with x == 0.
    contrib = coeff * logx                       # (tile_n, C)

    # Fold sublane groups with pure vreg adds (layout-free reshape, no XLU):
    folded = contrib.reshape(tile_n // 8, 8, num_classes).sum(axis=0)  # (8, C)

    out_ref[...] += folded                       # accumulate Σ true_dist*log(x)


def label_smoothing_loss(x, target, *, smoothing, split=2):
    """x: (N, C) probabilities (f32 or bf16), target: (N,) int class indices.

    Returns the scalar KLDivLoss(reduction='sum') against the label-smoothed
    distribution, matching the PyTorch LabelSmoothing module.
    """
    N, C = x.shape
    assert C >= 2, "size (num classes) must be >= 2 for label smoothing"
    confidence = 1.0 - smoothing
    smooth_val = smoothing / (C - 1)

    # ---- adaptive row-tile sizing (~2 MiB input blocks, multiple of 8 rows) --
    itemsize = jnp.dtype(x.dtype).itemsize
    target_block_bytes = 2 * 1024 * 1024
    tile_n = max(8, (target_block_bytes // (C * itemsize)) // 8 * 8)
    tile_n = min(tile_n, 1024)                       # cap fold depth / skew
    rows_per_split = -(-N // split)                  # ceil
    rows_per_split_pad = -(-rows_per_split // 8) * 8
    tile_n = int(min(tile_n, rows_per_split_pad))
    blocks_per_split = -(-rows_per_split // tile_n)  # ceil
    n_pad = split * blocks_per_split * tile_n

    # Pad rows with x = 1 (log 1 = 0 -> zero in-kernel contribution).
    if n_pad != N:
        x = jnp.pad(x, ((0, n_pad - N), (0, 0)), constant_values=1)
        target = jnp.pad(target, (0, n_pad - N))

    t2 = target.reshape(n_pad, 1).astype(jnp.int32)

    kernel = functools.partial(
        _label_smoothing_kernel,
        confidence=confidence, smooth_val=smooth_val,
        tile_n=tile_n, num_classes=C,
    )

    bps = blocks_per_split
    out = pl.pallas_call(
        kernel,
        out_shape=jax.ShapeDtypeStruct((split, 8, C), jnp.float32),
        grid_spec=pltpu.PrefetchScalarGridSpec(
            num_scalar_prefetch=0,
            grid=(split, bps),
            in_specs=[
                pl.BlockSpec((tile_n, C), lambda p, i: (p * bps + i, 0)),
                pl.BlockSpec((tile_n, 1), lambda p, i: (p * bps + i, 0)),
            ],
            # Squeezed leading dim; same block for all i -> resident accumulator.
            out_specs=pl.BlockSpec((None, 8, C), lambda p, i: (p, 0, 0)),
        ),
        compiler_params=pltpu.CompilerParams(
            dimension_semantics=("parallel", "arbitrary"),
            vmem_limit_bytes=32 * 1024 * 1024,
        ),
    )(x, t2)

    # Constant Σ xlogy(true_dist, true_dist): each real row has one `confidence`
    # entry and (C-1) `smooth_val` entries (xlogy(0, 0) := 0).
    def _xlogy(v):
        return v * math.log(v) if v > 0.0 else 0.0

    const_term = N * (_xlogy(confidence) + (C - 1) * _xlogy(smooth_val))

    # Final (tiny) cross-lane reduce done once here, not per grid step.
    return jnp.float32(const_term) - jnp.sum(out)


def _reference_loss(x, target, *, smoothing):
    N, C = x.shape
    confidence = 1.0 - smoothing
    smooth_val = smoothing / (C - 1)
    logx = jnp.log(x.astype(jnp.float32))
    true_dist = jnp.full((N, C), smooth_val, jnp.float32)
    true_dist = true_dist.at[jnp.arange(N), target].set(confidence)
    log_td = jnp.where(true_dist > 0, jnp.log(true_dist), 0.0)
    return jnp.sum(true_dist * (log_td - logx))


if __name__ == "__main__":
    key = jax.random.PRNGKey(0)
    smoothing = 0.1

    # Case 1: the module's natural small shape (batch=16, size/classes=32).
    N, C = 16, 32
    k1, k2, k3, k4 = jax.random.split(key, 4)
    logits = jax.random.normal(k1, (N, C), jnp.float32)
    x = jax.nn.softmax(logits, axis=-1)                      # probabilities
    target = jax.random.randint(k2, (N,), 0, C, jnp.int32)   # class indices

    loss = jax.block_until_ready(label_smoothing_loss(x, target, smoothing=smoothing))
    ref = _reference_loss(x, target, smoothing=smoothing)
    assert jnp.allclose(loss, ref, rtol=1e-5, atol=1e-4), (loss, ref)

    # Case 2: non-multiple-of-8 batch exercises the row-padding path.
    N2, C2 = 13, 32
    logits2 = jax.random.normal(k3, (N2, C2), jnp.float32)
    x2 = jax.nn.softmax(logits2, axis=-1)
    target2 = jax.random.randint(k4, (N2,), 0, C2, jnp.int32)

    loss2 = jax.block_until_ready(label_smoothing_loss(x2, target2, smoothing=smoothing))
    ref2 = _reference_loss(x2, target2, smoothing=smoothing)
    assert jnp.allclose(loss2, ref2, rtol=1e-5, atol=1e-4), (loss2, ref2)

    print("KERNEL_OK")
</pallas_src>

<mosaic_0001>
module attributes {stable_mosaic.version = 11 : i64} {
  func.func @_label_smoothing_kernel(%arg0: i32, %arg1: i32, %arg2: memref<8x32xf32, #tpu.memory_space<vmem>>, %arg3: memref<8x1xi32, #tpu.memory_space<vmem>>, %arg4: memref<1x8x32xf32, #tpu.memory_space<vmem>>) attributes {dimension_semantics = [#tpu.dimension_semantics<parallel>, #tpu.dimension_semantics<arbitrary>], iteration_bounds = array<i64: 2, 1>, scalar_prefetch = 0 : i64, scratch_operands = 0 : i64, tpu.core_type = #tpu.core_type<tc>, window_params = [{transform_indices = @transform_0, window_bounds = array<i64: 8, 32>}, {transform_indices = @transform_1, window_bounds = array<i64: 8, 1>}, {transform_indices = @transform_2, window_bounds = array<i64: 1, 8, 32>}]} {
    %c0_i32 = arith.constant 0 : i32
    %0 = arith.cmpi eq, %arg1, %c0_i32 : i32
    %1 = arith.extui %0 : i1 to i32
    %c0_i32_0 = arith.constant 0 : i32
    %2 = arith.cmpi ne, %1, %c0_i32_0 : i32
    scf.if %2 {
      %cst_12 = arith.constant 0.000000e+00 : f32
      %21 = vector.broadcast %cst_12 : f32 to vector<8x32xf32>
      %c0_13 = arith.constant 0 : index
      %c0_14 = arith.constant 0 : index
      %c0_15 = arith.constant 0 : index
      %22 = vector.load %arg4[%c0_13, %c0_14, %c0_15] : memref<1x8x32xf32, #tpu.memory_space<vmem>>, vector<1x8x32xf32>
      %23 = vector.shape_cast %22 : vector<1x8x32xf32> to vector<8x32xf32>
      %24 = vector.shape_cast %21 : vector<8x32xf32> to vector<1x8x32xf32>
      tpu.vector_store %arg4[%c0_13, %c0_14, %c0_15], %24 {strides = array<i32>} : memref<1x8x32xf32, #tpu.memory_space<vmem>>, vector<1x8x32xf32>,
    } else {
    }
    %c0 = arith.constant 0 : index
    %c0_1 = arith.constant 0 : index
    %3 = vector.load %arg2[%c0, %c0_1] : memref<8x32xf32, #tpu.memory_space<vmem>>, vector<8x32xf32>
    %4 = math.log %3 : vector<8x32xf32>
    %c0_2 = arith.constant 0 : index
    %c0_3 = arith.constant 0 : index
    %5 = vector.load %arg3[%c0_2, %c0_3] : memref<8x1xi32, #tpu.memory_space<vmem>>, vector<8x1xi32>
    %6 = tpu.iota {dimensions = array<i32: 1>} : vector<8x32xi32>
    %7 = vector.broadcast %5 : vector<8x1xi32> to vector<8x32xi32>
    %8 = arith.cmpi eq, %6, %7 : vector<8x32xi32>
    %cst = arith.constant 0.899999976 : f32
    %cst_4 = arith.constant 0.0032258064 : f32
    %9 = vector.broadcast %cst : f32 to vector<8x32xf32>
    %10 = vector.broadcast %cst_4 : f32 to vector<8x32xf32>
    %11 = arith.select %8, %9, %10 : vector<8x32xi1>, vector<8x32xf32>
    %12 = arith.mulf %11, %4 : vector<8x32xf32>
    %13 = vector.shape_cast %12 : vector<8x32xf32> to vector<1x8x32xf32>
    %cst_5 = arith.constant dense<0.000000e+00> : vector<8x32xf32>
    %14 = vector.multi_reduction <add>, %13, %cst_5 [0] : vector<1x8x32xf32> to vector<8x32xf32>
    %c0_6 = arith.constant 0 : index
    %c0_7 = arith.constant 0 : index
    %c0_8 = arith.constant 0 : index
    %15 = vector.load %arg4[%c0_6, %c0_7, %c0_8] : memref<1x8x32xf32, #tpu.memory_space<vmem>>, vector<1x8x32xf32>
    %16 = vector.shape_cast %15 : vector<1x8x32xf32> to vector<8x32xf32>
    %17 = arith.addf %16, %14 : vector<8x32xf32>
    %c0_9 = arith.constant 0 : index
    %c0_10 = arith.constant 0 : index
    %c0_11 = arith.constant 0 : index
    %18 = vector.load %arg4[%c0_9, %c0_10, %c0_11] : memref<1x8x32xf32, #tpu.memory_space<vmem>>, vector<1x8x32xf32>
    %19 = vector.shape_cast %18 : vector<1x8x32xf32> to vector<8x32xf32>
    %20 = vector.shape_cast %17 : vector<8x32xf32> to vector<1x8x32xf32>
    tpu.vector_store %arg4[%c0_9, %c0_10, %c0_11], %20 {strides = array<i32>} : memref<1x8x32xf32, #tpu.memory_space<vmem>>, vector<1x8x32xf32>,
    return
  }
  func.func @transform_0(%arg0: i32, %arg1: i32) -> (i32, i32) {
    %c1_i32 = arith.constant 1 : i32
    %0 = arith.muli %arg0, %c1_i32 : i32
    %1 = arith.addi %0, %arg1 : i32
    %c0_i32 = arith.constant 0 : i32
    %c0_i32_0 = arith.constant 0 : i32
    return %1, %c0_i32 : i32, i32
  }
  func.func @transform_1(%arg0: i32, %arg1: i32) -> (i32, i32) {
    %c1_i32 = arith.constant 1 : i32
    %0 = arith.muli %arg0, %c1_i32 : i32
    %1 = arith.addi %0, %arg1 : i32
    %c0_i32 = arith.constant 0 : i32
    %c0_i32_0 = arith.constant 0 : i32
    return %1, %c0_i32 : i32, i32
  }
  func.func @transform_2(%arg0: i32, %arg1: i32) -> (i32, i32, i32) {
    %c0_i32 = arith.constant 0 : i32
    %c0_i32_0 = arith.constant 0 : i32
    %c0_i32_1 = arith.constant 0 : i32
    return %arg0, %c0_i32, %c0_i32_0 : i32, i32, i32
  }
}

</mosaic_0001>

<llo_original>
// kernel: tpu_custom_call.1
$region0: #{tpu_custom_call.1}
  #allocation0 [shape = 'u32[]', space=smem, size = 0x4, offset = 0x4, fixed_abs, tag = 'smem constant byte address 0x4 - core index']
  #allocation1 [shape = 'u32[144,128]{1,0:T(1,128)}', space=vmem, size = 0x12000, scoped, tag = 'internal scratch']
  %s0 = inlined_call_operand.vmem [shape: f32[16,32], index: 0, kind: input, shape index: {}]
  %s1 = inlined_call_operand.vmem [shape: s32[16,1], index: 1, kind: input, shape index: {}]
  %s2 = inlined_call_operand.hbm [shape: f32[2,8,32], index: 2, kind: output, shape index: {}]
  %s3 = sld [smem:[#allocation0]]
  $region45: #{tpu_custom_call.1} parent=0
    _
  %s5 = ssub.s32 1, %s3
  %s6 = scalar_select 0, %s5, %s3
  $region1: #{tpu_custom_call.1} parent=0
    #allocation2 [shape = 'u8[8192]{0}', space=vmem, size = 0x2000, scoped, tag = 'output window, operand 0']
    #allocation3 [shape = 's32[2]{0}', space=sflag, size = 0x8, scoped, tag = 'scoped memory for tpu_custom_call.1']
    %7 = vsyncpa [#allocation3], 0
    %s8 = scalar_lea.sflag [#allocation3], 1
    %9 = vsyncpa %s8, 0
    loop: start=0, step=1, limit=4
    $region2: #{tpu_custom_call.1} parent=1 // loop_pre_header
      _
    $region3: #{tpu_custom_call.1} parent=1 // loop_header
      %s11 = sphi 0, %s15
      %p12 = scmp.ge.s32.totalorder %s11, 4
      %s18 = sphi 0, %s30
      %s19 = sphi 0, %s26
      %s20 = sphi 0, %s18
      %s21 = sphi 0, %s19
      %s22 = sphi 0, %s20
      %s23 = sphi 0, %s21
      %s35 = sphi 0, %s37
      %s38 = sphi 0, %s35
      %s39 = sphi 0, %s38
      %s55 = sphi 0, %s39
      %s63 = sphi 0, %s65
      %s66 = sphi 0, %s63
      %s67 = sphi 0, %s66
      %s83 = sphi 0, %s67
      %s89 = sphi 0, %s91
      %s92 = sphi 0, %s89
      %s93 = sphi 0, %s92
      %s109 = sphi 0, %s93
    $region4: #{tpu_custom_call.1} parent=1 // loop_header_branch
      %14 = sbr.rel (%p12) target = $region8
    $region5: #{tpu_custom_call.1} parent=1 // loop_body
      %s16 = ssub.s32 %s11, 1
      %s17 = ssub.s32 %s11, 2
      %s24 = sadd.s32 1, %s19
      %p25 = scmp.ge.s32.totalorder %s24, 1
      %s26 = scalar_select %p25, 0, %s24
      %s27 = sadd.s32 1, %s18
      %s28 = scalar_select %p25, %s27, %s18
      %p29 = scmp.ge.s32.totalorder %s28, 2
      %s30 = scalar_select %p29, 0, %s28
      %s31 = sadd.s32 %s18, %s19
      %s32 = sadd.s32 %s30, %s26
      %s33 = ssub.s32 %s31, %s32
      %p34 = scmp.eq.s32.totalorder %s33, 0
      %s36 = sadd.s32 %s35, 1
      %s37 = scalar_select %p34, %s35, %s36
      %p40 = pneg %p34
      %p41 = scmp.eq.s32.totalorder %s11, 1
      %p42 = por %p40, %p41
      %p43 = scmp.ne.s32.totalorder %s35, %s38
      %p44 = scmp.eq.s32.totalorder %s11, 0
      %p45 = por %p43, %p44
      %p46 = scmp.ne.s32.totalorder %s35, %s38
      %p47 = scmp.eq.s32.totalorder %s16, 1
      %p48 = por %p46, %p47
      %p49 = scmp.ne.s32.totalorder %s38, %s39
      %p50 = scmp.eq.s32.totalorder %s16, 0
      %p51 = por %p49, %p50
      %p52 = scmp.ne.s32.totalorder %s38, %s39
      %p53 = scmp.eq.s32.totalorder %s17, 1
      %p54 = por %p52, %p53
      %p56 = scmp.ne.s32.totalorder %s39, %s55
      %p57 = scmp.eq.s32.totalorder %s17, 0
      %p58 = por %p56, %p57
      %s59 = sadd.s32 %s18, %s19
      %s60 = sadd.s32 %s30, %s26
      %s61 = ssub.s32 %s59, %s60
      %p62 = scmp.eq.s32.totalorder %s61, 0
      %s64 = sadd.s32 %s63, 1
      %s65 = scalar_select %p62, %s63, %s64
      %p68 = pneg %p62
      %p69 = scmp.eq.s32.totalorder %s11, 1
      %p70 = por %p68, %p69
      %p71 = scmp.ne.s32.totalorder %s63, %s66
      %p72 = scmp.eq.s32.totalorder %s11, 0
      %p73 = por %p71, %p72
      %p74 = scmp.ne.s32.totalorder %s63, %s66
      %p75 = scmp.eq.s32.totalorder %s16, 1
      %p76 = por %p74, %p75
      %p77 = scmp.ne.s32.totalorder %s66, %s67
      %p78 = scmp.eq.s32.totalorder %s16, 0
      %p79 = por %p77, %p78
      %p80 = scmp.ne.s32.totalorder %s66, %s67
      %p81 = scmp.eq.s32.totalorder %s17, 1
      %p82 = por %p80, %p81
      %p84 = scmp.ne.s32.totalorder %s67, %s83
      %p85 = scmp.eq.s32.totalorder %s17, 0
      %p86 = por %p84, %p85
      %s87 = ssub.s32 %s18, %s30
      %p88 = scmp.eq.s32.totalorder %s87, 0
      %s90 = sadd.s32 %s89, 1
      %s91 = scalar_select %p88, %s89, %s90
      %p94 = pneg %p88
      %p95 = scmp.eq.s32.totalorder %s11, 1
      %p96 = por %p94, %p95
      %p97 = scmp.ne.s32.totalorder %s89, %s92
      %p98 = scmp.eq.s32.totalorder %s11, 0
      %p99 = por %p97, %p98
      %p100 = scmp.ne.s32.totalorder %s89, %s92
      %p101 = scmp.eq.s32.totalorder %s16, 1
      %p102 = por %p100, %p101
      %p103 = scmp.ne.s32.totalorder %s92, %s93
      %p104 = scmp.eq.s32.totalorder %s16, 0
      %p105 = por %p103, %p104
      %p106 = scmp.ne.s32.totalorder %s92, %s93
      %p107 = scmp.eq.s32.totalorder %s17, 1
      %p108 = por %p106, %p107
      %p110 = scmp.ne.s32.totalorder %s93, %s109
      %p111 = scmp.eq.s32.totalorder %s17, 0
      %p112 = por %p110, %p111
      %p113 = scmp.le.s32.totalorder 1, %s11
      %p114 = scmp.lt.s32.totalorder %s11, 3
      %p115 = pnand %p113, %p114
      %p116 = pneg %p115
      // Predicated region
      $region9: #{tpu_custom_call.1} parent=5 // pred_check
        _
      $region10: #{tpu_custom_call.1} parent=5 // pred_check_branch
        %118 = sbr.rel (%p115) target = $region12
      $region11: #{tpu_custom_call.1} parent=5 // pred_region
        %s119 = ssub.s32 %s11, 1
      $region12: #{tpu_custom_call.1} parent=5 // pred_fallthru
        _
      %p120 = scmp.lt.s32.totalorder %s11, 2
      // Predicated region
      $region13: #{tpu_custom_call.1} parent=5 // pred_check
        %p121 = pneg %p120
      $region14: #{tpu_custom_call.1} parent=5 // pred_check_branch
        %123 = sbr.rel (%p121) target = $region16
      $region15: #{tpu_custom_call.1} parent=5 // pred_region
        // Predicated region
        $region17: #{tpu_custom_call.1} parent=15 // pred_check
          %p124 = pneg %p45
        $region18: #{tpu_custom_call.1} parent=15 // pred_check_branch
          %126 = sbr.rel (%p124) target = $region20
        $region19: #{tpu_custom_call.1} parent=15 // pred_region
          %s127 = sadd.s32 %s18, %s19
          %p128 = scmp.lt.s32.totalorder %s127, 1
          %s129 = scalar_select %p128, %s127, 1
          %s130 = smul.addr %s129, 8
          %s131 = scalar_lea.vmem %s0, %s130
          %s132 = sadd.s32 %s18, %s19
        $region20: #{tpu_custom_call.1} parent=15 // pred_fallthru
          _
        // Predicated region
        $region21: #{tpu_custom_call.1} parent=15 // pred_check
          %p133 = pneg %p73
        $region22: #{tpu_custom_call.1} parent=15 // pred_check_branch
          %135 = sbr.rel (%p133) target = $region24
        $region23: #{tpu_custom_call.1} parent=15 // pred_region
          %s136 = sadd.s32 %s18, %s19
          %p137 = scmp.lt.s32.totalorder %s136, 1
          %s138 = scalar_select %p137, %s136, 1
          %s139 = smul.addr %s138, 8
          %s140 = scalar_lea.vmem %s1, %s139
          %s141 = sadd.s32 %s18, %s19
        $region24: #{tpu_custom_call.1} parent=15 // pred_fallthru
          _
      $region16: #{tpu_custom_call.1} parent=5 // pred_fallthru
        _
      %p142 = scmp.le.s32.totalorder 1, %s11
      %p143 = scmp.lt.s32.totalorder %s11, 3
      %p144 = pnand %p142, %p143
      %p145 = pneg %p144
      // Predicated region
      $region25: #{tpu_custom_call.1} parent=5 // pred_check
        _
      $region26: #{tpu_custom_call.1} parent=5 // pred_check_branch
        %147 = sbr.rel (%p144) target = $region28
      $region27: #{tpu_custom_call.1} parent=5 // pred_region
        %s148 = ssub.s32 %s11, 1
        %s149 = sadd.s32 %s20, %s21
        %p150 = scmp.lt.s32.totalorder %s149, 1
        %s151 = scalar_select %p150, %s149, 1
        %s152 = smul.addr %s151, 8
        %s153 = scalar_lea.vmem %s0, %s152
        %p154 = pneg %p51
        %p155 = pneg %p48
        %s156 = sadd.s32 %s20, %s21
        %p157 = scmp.lt.s32.totalorder %s156, 1
        %s158 = scalar_select %p157, %s156, 1
        %s159 = smul.addr %s158, 8
        %s160 = scalar_lea.vmem %s1, %s159
        %p161 = pneg %p79
        %p162 = pneg %p76
        %p163 = pneg %p105
        %p164 = pneg %p102
        %s165 = sand.u32 %s92, 1
        %s166 = scalar_lea.sflag [#allocation3], %s165
        %s167 = sand.u32 %s92, 1
        %s168 = smul.addr %s167, 8
        %s169 = scalar_lea.vmem [#allocation2], %s168
        %s170 = sadd.s32 %s20, %s21
        %p171 = scmp.lt.s32.totalorder %s170, 1
        %s172 = scalar_select %p171, %s170, 1
        %s173 = smul.addr %s172, 8
        %s174 = scalar_lea.vmem %s0, %s173
        %s175 = sadd.s32 %s20, %s21
        %s176 = sadd.s32 %s20, %s21
        %p177 = scmp.lt.s32.totalorder %s176, 1
        %s178 = scalar_select %p177, %s176, 1
        %s179 = smul.addr %s178, 8
        %s180 = scalar_lea.vmem %s1, %s179
        %s181 = sadd.s32 %s20, %s21
        %p182 = scmp.eq.s32.totalorder %s21, 0
        // Predicated region
        $region29: #{tpu_custom_call.1} parent=27 // pred_check
          %p183 = pneg %p182
        $region30: #{tpu_custom_call.1} parent=27 // pred_check_branch
          %185 = sbr.rel (%p183) target = $region32
        $region31: #{tpu_custom_call.1} parent=27 // pred_region
          %vm186 = vcmask 261120
          %187 = vst.msk [vmem:[%s169] sm:$0xff] %vm186, 0.0
        $region32: #{tpu_custom_call.1} parent=27 // pred_fallthru
          _
        %v188 = vld [vmem:[%s174] sm:$0xff]
        %v189 = vlog2.pop %v188
        %v190 = vmul.f32 %v189, 0.6931472
        %v191 = vld [vmem:[%s180] sm:$0xff]
        %v192 = vlaneseq
        %v193 = vand.u32 %v192, 127
        %194 = vset.pattern.permute.xlu0 0
        %195 = vperm.xlu0 %194, %v191
        %v196 = vpop.permute.xlu0 %195
        %vm197 = vcmp.eq.s32.totalorder %v193, %v196
        %v198 = vsel %vm197, 0.9, 0.0032258064
        %v199 = vmul.f32 %v198, %v190
        %v200 = vadd.f32 %v199, 0.0
        %v201 = vld [vmem:[%s169] sm:$0xff]
        %v202 = vadd.f32 %v201, %v200
        %vm203 = vcmask 261120
        %204 = vst.msk [vmem:[%s169] sm:$0xff] %vm203, %v202
        %s205 = sand.u32 %s92, 1
        %s206 = scalar_lea.sflag [#allocation3], %s205
        %s207 = sand.u32 %s92, 1
        %s208 = smul.addr %s207, 8
        %s209 = scalar_lea.vmem [#allocation2], %s208
        // Predicated region
        $region33: #{tpu_custom_call.1} parent=27 // pred_check
          %p210 = pneg %p102
        $region34: #{tpu_custom_call.1} parent=27 // pred_check_branch
          %212 = sbr.rel (%p210) target = $region36
        $region35: #{tpu_custom_call.1} parent=27 // pred_region
          %s214 = ssub.s32 128, 128
          %215 = vsyncadd %s206, %s214
          %s216 = smul.addr %s20, 128
          %s217 = scalar_lea.hbm %s2, %s216
          %s219 = sshll.u32 %s209, 4
          %s220 = int_to_ptr.vmem [resolvable:$true] %s219
          %222 = dma.vmem_to_hbm [thread:$0]  %s220, 128, %s217, %s206
        $region36: #{tpu_custom_call.1} parent=27 // pred_fallthru
          _
      $region28: #{tpu_custom_call.1} parent=5 // pred_fallthru
        _
      %p223 = scmp.le.s32.totalorder 2, %s11
      // Predicated region
      $region37: #{tpu_custom_call.1} parent=5 // pred_check
        %p224 = pneg %p223
      $region38: #{tpu_custom_call.1} parent=5 // pred_check_branch
        %226 = sbr.rel (%p224) target = $region40
      $region39: #{tpu_custom_call.1} parent=5 // pred_region
        %s227 = ssub.s32 %s11, 2
        // Predicated region
        $region41: #{tpu_custom_call.1} parent=39 // pred_check
          %p228 = pneg %p108
        $region42: #{tpu_custom_call.1} parent=39 // pred_check_branch
          %230 = sbr.rel (%p228) target = $region44
        $region43: #{tpu_custom_call.1} parent=39 // pred_region
          %s231 = sand.u32 %s93, 1
          %s232 = scalar_lea.sflag [#allocation3], %s231
          %s233 = sand.u32 %s93, 1
          %s234 = smul.addr %s233, 8
          %s235 = scalar_lea.vmem [#allocation2], %s234
          %236 = dma.done %s232, 128
        $region44: #{tpu_custom_call.1} parent=39 // pred_fallthru
          _
      $region40: #{tpu_custom_call.1} parent=5 // pred_fallthru
        _
    $region6: #{tpu_custom_call.1} parent=1 // loop_footer
      %s15 = sadd.s32 1, %s11
    $region7: #{tpu_custom_call.1} parent=1 // loop_footer_branch
      %10 = sbr.rel target = $region3
    $region8: #{tpu_custom_call.1} parent=1 // loop_exit
      _
    %237 = vsyncpa [#allocation3], 1
    %s238 = scalar_lea.sflag [#allocation3], 1
    %239 = vsyncpa %s238, 1

</llo_original>
